<compile_context>
chip_gen: v7x
topology: tpu7x:2x2x1
jax: 0.10.0
libtpu: 0.0.40
codegen_flags: <defaults>
</compile_context>

<pallas_src>
import jax
import jax.numpy as jnp
from jax.experimental import pallas as pl
from jax.experimental.pallas import tpu as pltpu


def critic_kernel(state_ref, action_ref, w1s_ref, w1a_ref, b1_ref,
                  w2_ref, b2_ref, w3_ref, b3_ref, o_ref):
    # fc1: split matmul avoids materializing cat([state, action]).
    h1 = jnp.dot(state_ref[...], w1s_ref[...],
                 preferred_element_type=jnp.float32)
    h1 = h1 + jnp.dot(action_ref[...], w1a_ref[...],
                      preferred_element_type=jnp.float32)
    h1 = jnp.maximum(h1 + b1_ref[...], 0.0)                       # (TM, H)

    # fc2
    h2 = jnp.dot(h1, w2_ref[...], preferred_element_type=jnp.float32)
    h2 = jnp.maximum(h2 + b2_ref[...], 0.0)                       # (TM, H)

    # fc3 (N=1): VPU multiply + lane reduce instead of a 1-column MXU pass.
    q = jnp.sum(h2 * w3_ref[...], axis=-1, keepdims=True)          # (TM, 1)
    o_ref[...] = (q + b3_ref[0]).astype(o_ref.dtype)               # b3 scalar (SMEM)


def prepare_params(params, state_size):
    """One-time repack of PyTorch-layout params into the kernel layout."""
    S = state_size
    w1 = params["w1"]                            # (S+A, H), stored (in, out)
    return {
        "w1s": w1[:S],                           # (S, H)
        "w1a": w1[S:],                           # (A, H)
        "b1": params["b1"],                      # (1, H)
        "w2": params["w2"],                      # (H, H)
        "b2": params["b2"],                      # (1, H)
        "w3_row": params["w3"].reshape(1, -1),   # (1, H) row for lane reduce
        "b3": params["b3"].reshape((1,)),        # scalar for SMEM
    }


def _pick_batch_tile(B):
    """Largest divisor of B that is <= 256 (keeps blocks VMEM-friendly)."""
    if B <= 256:
        return B
    for cand in (256, 128, 64, 32, 16, 8, 4, 2, 1):
        if B % cand == 0:
            return cand
    return B


def critic_forward(state, action, kp):
    """state: (B, S), action: (B, A); kp: output of prepare_params."""
    B, S = state.shape
    _, A = action.shape
    H = kp["w2"].shape[0]

    tm = _pick_batch_tile(B)
    grid = (B // tm,)

    def row_spec(shape):          # batch-tiled activations / output
        return pl.BlockSpec(shape, lambda i: (i, 0))

    def rep_spec(shape):          # weights/biases: same full block every step
        return pl.BlockSpec(shape, lambda i: (0, 0))

    return pl.pallas_call(
        critic_kernel,
        out_shape=jax.ShapeDtypeStruct((B, 1), jnp.float32),
        grid=grid,
        in_specs=[
            row_spec((tm, S)),                                   # state
            row_spec((tm, A)),                                   # action
            rep_spec((S, H)),                                    # w1_state
            rep_spec((A, H)),                                    # w1_action
            rep_spec((1, H)),                                    # b1
            rep_spec((H, H)),                                    # w2
            rep_spec((1, H)),                                    # b2
            rep_spec((1, H)),                                    # w3 row
            pl.BlockSpec(memory_space=pltpu.MemorySpace.SMEM),   # b3 scalar
        ],
        out_specs=row_spec((tm, 1)),
        compiler_params=pltpu.CompilerParams(
            dimension_semantics=("parallel",)),
    )(state, action, kp["w1s"], kp["w1a"], kp["b1"], kp["w2"], kp["b2"],
      kp["w3_row"], kp["b3"])


def init_params(key, state_size, hidden_size, action_size):
    """Deterministic init matching nn.Linear shapes (stored transposed as (in, out))."""
    in1 = state_size + action_size
    k1, k2, k3, k4, k5, k6 = jax.random.split(key, 6)

    def lin(kw, kb, fan_in, fan_out):
        bound = 1.0 / jnp.sqrt(fan_in)
        w = jax.random.uniform(kw, (fan_in, fan_out), jnp.float32, -bound, bound)
        b = jax.random.uniform(kb, (1, fan_out), jnp.float32, -bound, bound)
        return w, b

    w1, b1 = lin(k1, k2, in1, hidden_size)
    w2, b2 = lin(k3, k4, hidden_size, hidden_size)
    w3, b3 = lin(k5, k6, hidden_size, 1)
    return {"w1": w1, "b1": b1, "w2": w2, "b2": b2, "w3": w3, "b3": b3}


def critic_reference(state, action, params):
    """Pure-JAX reference in the original (concat + full w1) formulation."""
    x = jnp.concatenate([state, action], axis=1)
    h1 = jnp.maximum(x @ params["w1"] + params["b1"], 0.0)
    h2 = jnp.maximum(h1 @ params["w2"] + params["b2"], 0.0)
    return h2 @ params["w3"] + params["b3"]


if __name__ == "__main__":
    batch = 8
    state_size = 12
    action_size = 4
    hidden_size = 32

    key = jax.random.PRNGKey(0)
    kparam, ks, ka = jax.random.split(key, 3)
    params = init_params(kparam, state_size, hidden_size, action_size)
    kp = prepare_params(params, state_size)
    state = jax.random.normal(ks, (batch, state_size), jnp.float32)
    action = jax.random.normal(ka, (batch, action_size), jnp.float32)

    q = critic_forward(state, action, kp)
    jax.block_until_ready(q)

    q_ref = critic_reference(state, action, params)
    assert q.shape == (batch, 1)
    assert jnp.allclose(q, q_ref, atol=1e-5, rtol=1e-5)
    print("KERNEL_OK")
</pallas_src>

<mosaic_0001>
module attributes {stable_mosaic.version = 11 : i64} {
  func.func @critic_kernel(%arg0: i32, %arg1: memref<8x12xf32, #tpu.memory_space<vmem>>, %arg2: memref<8x4xf32, #tpu.memory_space<vmem>>, %arg3: memref<12x32xf32, #tpu.memory_space<vmem>>, %arg4: memref<4x32xf32, #tpu.memory_space<vmem>>, %arg5: memref<1x32xf32, #tpu.memory_space<vmem>>, %arg6: memref<32x32xf32, #tpu.memory_space<vmem>>, %arg7: memref<1x32xf32, #tpu.memory_space<vmem>>, %arg8: memref<1x32xf32, #tpu.memory_space<vmem>>, %arg9: memref<1xf32, #tpu.memory_space<smem>>, %arg10: memref<8x1xf32, #tpu.memory_space<vmem>>) attributes {dimension_semantics = [#tpu.dimension_semantics<parallel>], iteration_bounds = array<i64: 1>, scalar_prefetch = 0 : i64, scratch_operands = 0 : i64, tpu.core_type = #tpu.core_type<tc>, window_params = [{transform_indices = @transform_0, window_bounds = array<i64: 8, 12>}, {transform_indices = @transform_1, window_bounds = array<i64: 8, 4>}, {pipeline_mode = #tpu.pipeline_mode<synchronous>, transform_indices = @transform_2, window_bounds = array<i64: 12, 32>}, {pipeline_mode = #tpu.pipeline_mode<synchronous>, transform_indices = @transform_3, window_bounds = array<i64: 4, 32>}, {pipeline_mode = #tpu.pipeline_mode<synchronous>, transform_indices = @transform_4, window_bounds = array<i64: 1, 32>}, {pipeline_mode = #tpu.pipeline_mode<synchronous>, transform_indices = @transform_5, window_bounds = array<i64: 32, 32>}, {pipeline_mode = #tpu.pipeline_mode<synchronous>, transform_indices = @transform_6, window_bounds = array<i64: 1, 32>}, {pipeline_mode = #tpu.pipeline_mode<synchronous>, transform_indices = @transform_7, window_bounds = array<i64: 1, 32>}, {transform_indices = @transform_8, window_bounds = array<i64: 1>}, {transform_indices = @transform_9, window_bounds = array<i64: 8, 1>}]} {
    %c0 = arith.constant 0 : index
    %c0_0 = arith.constant 0 : index
    %0 = vector.load %arg1[%c0, %c0_0] : memref<8x12xf32, #tpu.memory_space<vmem>>, vector<8x12xf32>
    %c0_1 = arith.constant 0 : index
    %c0_2 = arith.constant 0 : index
    %1 = vector.load %arg3[%c0_1, %c0_2] : memref<12x32xf32, #tpu.memory_space<vmem>>, vector<12x32xf32>
    %cst = arith.constant dense<0.000000e+00> : vector<8x32xf32>
    %2 = tpu.matmul %0, %1, %cst {dimension_numbers = #tpu.dot_dimension_numbers<[1], [0], [0], [1], [0, 0, 1, 1], [], []>} : vector<8x12xf32>, vector<12x32xf32>, vector<8x32xf32> -> vector<8x32xf32>
    %c0_3 = arith.constant 0 : index
    %c0_4 = arith.constant 0 : index
    %3 = vector.load %arg2[%c0_3, %c0_4] : memref<8x4xf32, #tpu.memory_space<vmem>>, vector<8x4xf32>
    %c0_5 = arith.constant 0 : index
    %c0_6 = arith.constant 0 : index
    %4 = vector.load %arg4[%c0_5, %c0_6] : memref<4x32xf32, #tpu.memory_space<vmem>>, vector<4x32xf32>
    %cst_7 = arith.constant dense<0.000000e+00> : vector<8x32xf32>
    %5 = tpu.matmul %3, %4, %cst_7 {dimension_numbers = #tpu.dot_dimension_numbers<[1], [0], [0], [1], [0, 0, 1, 1], [], []>} : vector<8x4xf32>, vector<4x32xf32>, vector<8x32xf32> -> vector<8x32xf32>
    %6 = arith.addf %2, %5 : vector<8x32xf32>
    %c0_8 = arith.constant 0 : index
    %c0_9 = arith.constant 0 : index
    %7 = vector.load %arg5[%c0_8, %c0_9] : memref<1x32xf32, #tpu.memory_space<vmem>>, vector<1x32xf32>
    %8 = vector.broadcast %7 : vector<1x32xf32> to vector<8x32xf32>
    %9 = arith.addf %6, %8 : vector<8x32xf32>
    %cst_10 = arith.constant 0.000000e+00 : f32
    %10 = vector.broadcast %cst_10 : f32 to vector<8x32xf32>
    %11 = arith.maximumf %9, %10 : vector<8x32xf32>
    %c0_11 = arith.constant 0 : index
    %c0_12 = arith.constant 0 : index
    %12 = vector.load %arg6[%c0_11, %c0_12] : memref<32x32xf32, #tpu.memory_space<vmem>>, vector<32x32xf32>
    %cst_13 = arith.constant dense<0.000000e+00> : vector<8x32xf32>
    %13 = tpu.matmul %11, %12, %cst_13 {dimension_numbers = #tpu.dot_dimension_numbers<[1], [0], [0], [1], [0, 0, 1, 1], [], []>} : vector<8x32xf32>, vector<32x32xf32>, vector<8x32xf32> -> vector<8x32xf32>
    %c0_14 = arith.constant 0 : index
    %c0_15 = arith.constant 0 : index
    %14 = vector.load %arg7[%c0_14, %c0_15] : memref<1x32xf32, #tpu.memory_space<vmem>>, vector<1x32xf32>
    %15 = vector.broadcast %14 : vector<1x32xf32> to vector<8x32xf32>
    %16 = arith.addf %13, %15 : vector<8x32xf32>
    %cst_16 = arith.constant 0.000000e+00 : f32
    %17 = vector.broadcast %cst_16 : f32 to vector<8x32xf32>
    %18 = arith.maximumf %16, %17 : vector<8x32xf32>
    %c0_17 = arith.constant 0 : index
    %c0_18 = arith.constant 0 : index
    %19 = vector.load %arg8[%c0_17, %c0_18] : memref<1x32xf32, #tpu.memory_space<vmem>>, vector<1x32xf32>
    %20 = vector.broadcast %19 : vector<1x32xf32> to vector<8x32xf32>
    %21 = arith.mulf %18, %20 : vector<8x32xf32>
    %cst_19 = arith.constant dense<0.000000e+00> : vector<8xf32>
    %22 = vector.multi_reduction <add>, %21, %cst_19 [1] : vector<8x32xf32> to vector<8xf32>
    %23 = vector.shape_cast %22 : vector<8xf32> to vector<8x1xf32>
    %c0_20 = arith.constant 0 : index
    %24 = memref.load %arg9[%c0_20] : memref<1xf32, #tpu.memory_space<smem>>
    %25 = vector.broadcast %24 : f32 to vector<8x1xf32>
    %26 = arith.addf %23, %25 : vector<8x1xf32>
    %c0_21 = arith.constant 0 : index
    %c0_22 = arith.constant 0 : index
    %27 = vector.load %arg10[%c0_21, %c0_22] : memref<8x1xf32, #tpu.memory_space<vmem>>, vector<8x1xf32>
    tpu.vector_store %arg10[%c0_21, %c0_22], %26 {strides = array<i32>} : memref<8x1xf32, #tpu.memory_space<vmem>>, vector<8x1xf32>,
    return
  }
  func.func @transform_0(%arg0: i32) -> (i32, i32) {
    %c0_i32 = arith.constant 0 : i32
    %c0_i32_0 = arith.constant 0 : i32
    return %arg0, %c0_i32 : i32, i32
  }
  func.func @transform_1(%arg0: i32) -> (i32, i32) {
    %c0_i32 = arith.constant 0 : i32
    %c0_i32_0 = arith.constant 0 : i32
    return %arg0, %c0_i32 : i32, i32
  }
  func.func @transform_2(%arg0: i32) -> (i32, i32) {
    %c0_i32 = arith.constant 0 : i32
    %c0_i32_0 = arith.constant 0 : i32
    %c0_i32_1 = arith.constant 0 : i32
    return %c0_i32, %c0_i32_0 : i32, i32
  }
  func.func @transform_3(%arg0: i32) -> (i32, i32) {
    %c0_i32 = arith.constant 0 : i32
    %c0_i32_0 = arith.constant 0 : i32
    %c0_i32_1 = arith.constant 0 : i32
    return %c0_i32, %c0_i32_0 : i32, i32
  }
  func.func @transform_4(%arg0: i32) -> (i32, i32) {
    %c0_i32 = arith.constant 0 : i32
    %c0_i32_0 = arith.constant 0 : i32
    %c0_i32_1 = arith.constant 0 : i32
    return %c0_i32, %c0_i32_0 : i32, i32
  }
  func.func @transform_5(%arg0: i32) -> (i32, i32) {
    %c0_i32 = arith.constant 0 : i32
    %c0_i32_0 = arith.constant 0 : i32
    %c0_i32_1 = arith.constant 0 : i32
    return %c0_i32, %c0_i32_0 : i32, i32
  }
  func.func @transform_6(%arg0: i32) -> (i32, i32) {
    %c0_i32 = arith.constant 0 : i32
    %c0_i32_0 = arith.constant 0 : i32
    %c0_i32_1 = arith.constant 0 : i32
    return %c0_i32, %c0_i32_0 : i32, i32
  }
  func.func @transform_7(%arg0: i32) -> (i32, i32) {
    %c0_i32 = arith.constant 0 : i32
    %c0_i32_0 = arith.constant 0 : i32
    %c0_i32_1 = arith.constant 0 : i32
    return %c0_i32, %c0_i32_0 : i32, i32
  }
  func.func @transform_8(%arg0: i32) -> i32 {
    %c0_i32 = arith.constant 0 : i32
    %c0_i32_0 = arith.constant 0 : i32
    return %c0_i32 : i32
  }
  func.func @transform_9(%arg0: i32) -> (i32, i32) {
    %c0_i32 = arith.constant 0 : i32
    %c0_i32_0 = arith.constant 0 : i32
    return %arg0, %c0_i32 : i32, i32
  }
}

</mosaic_0001>

<llo_original>
// kernel: tpu_custom_call.1
$region0: #{tpu_custom_call.1}
  #allocation0 [shape = 'u32[]', space=smem, size = 0x4, offset = 0x4, fixed_abs, tag = 'smem constant byte address 0x4 - core index']
  #allocation1 [shape = 'u32[144,128]{1,0:T(1,128)}', space=vmem, size = 0x12000, scoped, tag = 'internal scratch']
  #allocation2 [shape = 'f32[1]{0:T(128)S(6)}', space=smem, size = 0x200, scoped, tag = 'scoped memory for tpu_custom_call.1']
  %s0 = inlined_call_operand.hbm [shape: f32[8,12], index: 0, kind: input, shape index: {}]
  %s1 = inlined_call_operand.vmem [shape: f32[8,4], index: 1, kind: input, shape index: {}]
  %s2 = inlined_call_operand.hbm [shape: f32[12,32], index: 2, kind: input, shape index: {}]
  %s3 = inlined_call_operand.hbm [shape: f32[4,32], index: 3, kind: input, shape index: {}]
  %s4 = inlined_call_operand.vmem [shape: f32[1,32], index: 4, kind: input, shape index: {}]
  %s5 = inlined_call_operand.vmem [shape: f32[32,32], index: 5, kind: input, shape index: {}]
  %s6 = inlined_call_operand.vmem [shape: f32[1,32], index: 6, kind: input, shape index: {}]
  %s7 = inlined_call_operand.vmem [shape: f32[1,32], index: 7, kind: input, shape index: {}]
  %s8 = inlined_call_operand.<no memory space> [shape: f32[1], index: 8, kind: input, shape index: {}]
  %s9 = inlined_call_operand.vmem [shape: f32[8,1], index: 9, kind: output, shape index: {}]
  %s10 = sld [smem:[#allocation0]]
  $region58: #{tpu_custom_call.1} parent=0
    _
  %s12 = ssub.s32 1, %s10
  %s13 = scalar_select 0, %s12, %s10
  %14 = sst [smem:[#allocation2]] %s8
  $region1: #{tpu_custom_call.1} parent=0
    #allocation3 [shape = 'u8[4096]{0}', space=vmem, size = 0x1000, scoped, tag = 'input window, operand 0, single buffered']
    #allocation4 [shape = 's32[1]{0}', space=sflag, size = 0x4, scoped, tag = 'scoped memory for tpu_custom_call.1']
    #allocation5 [shape = 'u8[8192]{0}', space=vmem, size = 0x2000, scoped, tag = 'input window, operand 2, single buffered']
    #allocation6 [shape = 's32[1]{0}', space=sflag, size = 0x4, scoped, tag = 'scoped memory for tpu_custom_call.1']
    #allocation7 [shape = 'u8[2048]{0}', space=vmem, size = 0x800, scoped, tag = 'input window, operand 3, single buffered']
    %15 = vsyncpa [#allocation4], 0
    %16 = vsyncpa [#allocation6], 0
    // Predicated region
    $region2: #{tpu_custom_call.1} parent=1 // pred_check
      _
    $region3: #{tpu_custom_call.1} parent=1 // pred_check_branch
      %18 = sbr.rel (0) target = $region5
    $region4: #{tpu_custom_call.1} parent=1 // pred_region
      %s20 = ssub.s32 128, 128
      %21 = vsyncadd [#allocation4], %s20
      %s23 = sshll.u32 [#allocation3], 4
      %s24 = int_to_ptr.vmem [resolvable:$true] %s23
      %26 = dma.hbm_to_vmem [thread:$0]  %s0, 128, %s24, [#allocation4]
    $region5: #{tpu_custom_call.1} parent=1 // pred_fallthru
      _
    // Predicated region
    $region6: #{tpu_custom_call.1} parent=1 // pred_check
      _
    $region7: #{tpu_custom_call.1} parent=1 // pred_check_branch
      %28 = sbr.rel (0) target = $region9
    $region8: #{tpu_custom_call.1} parent=1 // pred_region
      _
    $region9: #{tpu_custom_call.1} parent=1 // pred_fallthru
      _
    // Predicated region
    $region10: #{tpu_custom_call.1} parent=1 // pred_check
      _
    $region11: #{tpu_custom_call.1} parent=1 // pred_check_branch
      %30 = sbr.rel (0) target = $region13
    $region12: #{tpu_custom_call.1} parent=1 // pred_region
      %s32 = ssub.s32 256, 256
      %33 = vsyncadd [#allocation6], %s32
      %s34 = sshll.u32 [#allocation5], 4
      %s35 = int_to_ptr.vmem [resolvable:$true] %s34
      %40 = dma.hbm_to_vmem [thread:$0]  %s2, 256, %s35, [#allocation6], 128, 128, 8
    $region13: #{tpu_custom_call.1} parent=1 // pred_fallthru
      _
    // Predicated region
    $region14: #{tpu_custom_call.1} parent=1 // pred_check
      _
    $region15: #{tpu_custom_call.1} parent=1 // pred_check_branch
      %42 = sbr.rel (0) target = $region17
    $region16: #{tpu_custom_call.1} parent=1 // pred_region
      %s44 = ssub.s32 64, 64
      %45 = vsyncadd [#allocation6], %s44
      %s47 = sshll.u32 [#allocation7], 4
      %s48 = int_to_ptr.vmem [resolvable:$true] %s47
      %50 = dma.hbm_to_vmem [thread:$0]  %s3, 64, %s48, [#allocation6]
    $region17: #{tpu_custom_call.1} parent=1 // pred_fallthru
      _
    // Predicated region
    $region18: #{tpu_custom_call.1} parent=1 // pred_check
      _
    $region19: #{tpu_custom_call.1} parent=1 // pred_check_branch
      %52 = sbr.rel (0) target = $region21
    $region20: #{tpu_custom_call.1} parent=1 // pred_region
      _
    $region21: #{tpu_custom_call.1} parent=1 // pred_fallthru
      _
    // Predicated region
    $region22: #{tpu_custom_call.1} parent=1 // pred_check
      _
    $region23: #{tpu_custom_call.1} parent=1 // pred_check_branch
      %54 = sbr.rel (0) target = $region25
    $region24: #{tpu_custom_call.1} parent=1 // pred_region
      _
    $region25: #{tpu_custom_call.1} parent=1 // pred_fallthru
      _
    // Predicated region
    $region26: #{tpu_custom_call.1} parent=1 // pred_check
      _
    $region27: #{tpu_custom_call.1} parent=1 // pred_check_branch
      %56 = sbr.rel (0) target = $region29
    $region28: #{tpu_custom_call.1} parent=1 // pred_region
      _
    $region29: #{tpu_custom_call.1} parent=1 // pred_fallthru
      _
    // Predicated region
    $region30: #{tpu_custom_call.1} parent=1 // pred_check
      _
    $region31: #{tpu_custom_call.1} parent=1 // pred_check_branch
      %58 = sbr.rel (0) target = $region33
    $region32: #{tpu_custom_call.1} parent=1 // pred_region
      _
    $region33: #{tpu_custom_call.1} parent=1 // pred_fallthru
      _
    // Predicated region
    $region34: #{tpu_custom_call.1} parent=1 // pred_check
      _
    $region35: #{tpu_custom_call.1} parent=1 // pred_check_branch
      %60 = sbr.rel (0) target = $region37
    $region36: #{tpu_custom_call.1} parent=1 // pred_region
      _
    $region37: #{tpu_custom_call.1} parent=1 // pred_fallthru
      _
    // Predicated region
    $region38: #{tpu_custom_call.1} parent=1 // pred_check
      _
    $region39: #{tpu_custom_call.1} parent=1 // pred_check_branch
      %62 = sbr.rel (0) target = $region41
    $region40: #{tpu_custom_call.1} parent=1 // pred_region
      %63 = dma.done [#allocation4], 128
    $region41: #{tpu_custom_call.1} parent=1 // pred_fallthru
      _
    // Predicated region
    $region42: #{tpu_custom_call.1} parent=1 // pred_check
      _
    $region43: #{tpu_custom_call.1} parent=1 // pred_check_branch
      %65 = sbr.rel (0) target = $region45
    $region44: #{tpu_custom_call.1} parent=1 // pred_region
      %66 = dma.done [#allocation6], 256
    $region45: #{tpu_custom_call.1} parent=1 // pred_fallthru
      _
    // Predicated region
    $region46: #{tpu_custom_call.1} parent=1 // pred_check
      _
    $region47: #{tpu_custom_call.1} parent=1 // pred_check_branch
      %68 = sbr.rel (0) target = $region49
    $region48: #{tpu_custom_call.1} parent=1 // pred_region
      %69 = dma.done [#allocation6], 64
    $region49: #{tpu_custom_call.1} parent=1 // pred_fallthru
      _
    %v70 = vld [vmem:[#allocation3] sm:$0xff]
    %v71 = vld [vmem:[#allocation5] sm:$0xff]
    %v72 = vld [vmem:[#allocation5 + $0x8] sm:$0xf]
    %v73 = vld [vmem:[%s1] sm:$0xff]
    %v74 = vld [vmem:[#allocation7] sm:$0xf]
    %vm75 = vcmask 31744
    %v77 = vsel %vm75, %v73, 0
    %vm79 = vcmask 1043456
    %v81 = vsel %vm79, %v74, 0
    %83 = vmatprep.subr.mxu0 0.0
    %84 = vmatpush1.msra.mxu0 %v81
    %85 = vmatprep.subr.mxu0 0.0
    %86 = vmatpush1.msra.mxu0 0.0
    %87 = vmatprep.subr.mxu0 0.0
    %88 = vmatpush1.msra.mxu0 0.0
    %89 = vmatprep.subr.mxu0 0.0
    %90 = vmatpush1.msra.mxu0 0.0
    %91 = vmatprep.subr.mxu0 0.0
    %92 = vmatpush1.msra.mxu0 0.0
    %93 = vmatprep.subr.mxu0 0.0
    %94 = vmatpush1.msra.mxu0 0.0
    %95 = vmatprep.subr.mxu0 0.0
    %96 = vmatpush1.msra.mxu0 0.0
    %97 = vmatprep.subr.mxu0 0.0
    %98 = vmatpush1.msra.mxu0 0.0
    %99 = vmatprep.subr.mxu0 0.0
    %100 = vmatpush1.msra.mxu0 0.0
    %101 = vmatprep.subr.mxu0 0.0
    %102 = vmatpush1.msra.mxu0 0.0
    %103 = vmatprep.subr.mxu0 0.0
    %104 = vmatpush1.msra.mxu0 0.0
    %105 = vmatprep.subr.mxu0 0.0
    %106 = vmatpush1.msra.mxu0 0.0
    %107 = vmatprep.subr.mxu0 0.0
    %108 = vmatpush1.msra.mxu0 0.0
    %109 = vmatprep.subr.mxu0 0.0
    %110 = vmatpush1.msra.mxu0 0.0
    %111 = vmatprep.subr.mxu0 0.0
    %112 = vmatpush1.msra.mxu0 0.0
    %113 = vmatprep.subr.mxu0 0.0
    %114 = vmatpush1.msra.mxu0 0.0
    %115 = vmatprep.subr.mxu0 0.0
    %116 = vmatpush1.msra.mxu0 0.0
    %117 = vmatprep.subr.mxu0 0.0
    %118 = vmatpush1.msra.mxu0 0.0
    %119 = vmatprep.subr.mxu0 0.0
    %120 = vmatpush1.msra.mxu0 0.0
    %121 = vmatprep.subr.mxu0 0.0
    %122 = vmatpush1.msra.mxu0 0.0
    %123 = vmatprep.subr.mxu0 0.0
    %124 = vmatpush1.msra.mxu0 0.0
    %125 = vmatprep.subr.mxu0 0.0
    %126 = vmatpush1.msra.mxu0 0.0
    %127 = vmatprep.subr.mxu0 0.0
    %128 = vmatpush1.msra.mxu0 0.0
    %129 = vmatprep.subr.mxu0 0.0
    %130 = vmatpush1.msra.mxu0 0.0
    %131 = vmatprep.subr.mxu0 0.0
    %132 = vmatpush1.msra.mxu0 0.0
    %133 = vmatprep.subr.mxu0 0.0
    %134 = vmatpush1.msra.mxu0 0.0
    %135 = vmatprep.subr.mxu0 0.0
    %136 = vmatpush1.msra.mxu0 0.0
    %137 = vmatprep.subr.mxu0 0.0
    %138 = vmatpush1.msra.mxu0 0.0
    %139 = vmatprep.subr.mxu0 0.0
    %140 = vmatpush1.msra.mxu0 0.0
    %141 = vmatprep.subr.mxu0 0.0
    %142 = vmatpush1.msra.mxu0 0.0
    %143 = vmatprep.subr.mxu0 0.0
    %144 = vmatpush1.msra.mxu0 0.0
    %145 = vmatprep.subr.mxu0 0.0
    %146 = vmatpush1.msra.mxu0 0.0
    %147 = vmatprep.mubr.f32.mxu0 0.0
    %148 = vmatmul.mubr.f32.gmra.mrb[0].mxu0 %v77
    %v149 = vpop.f32.mrb[0].mxu0
    %v150 = vadd.f32 0.0, %v149
    %v151 = vpop.f32.mrb[0].mxu0
    %152 = vdwg.mxu0
    %vm153 = vcmask 97280
    %v155 = vsel %vm153, %v70, 0
    %v158 = vsel %vm79, %v72, 0
    %160 = vmatprep.subr.mxu0 0.0
    %161 = vmatpush1.msra.mxu0 %v71
    %162 = vmatprep.subr.mxu0 0.0
    %163 = vmatpush1.msra.mxu0 %v158
    %164 = vmatprep.subr.mxu0 0.0
    %165 = vmatpush1.msra.mxu0 0.0
    %166 = vmatprep.subr.mxu0 0.0
    %167 = vmatpush1.msra.mxu0 0.0
    %168 = vmatprep.subr.mxu0 0.0
    %169 = vmatpush1.msra.mxu0 0.0
    %170 = vmatprep.subr.mxu0 0.0
    %171 = vmatpush1.msra.mxu0 0.0
    %172 = vmatprep.subr.mxu0 0.0
    %173 = vmatpush1.msra.mxu0 0.0
    %174 = vmatprep.subr.mxu0 0.0
    %175 = vmatpush1.msra.mxu0 0.0
    %176 = vmatprep.subr.mxu0 0.0
    %177 = vmatpush1.msra.mxu0 0.0
    %178 = vmatprep.subr.mxu0 0.0
    %179 = vmatpush1.msra.mxu0 0.0
    %180 = vmatprep.subr.mxu0 0.0
    %181 = vmatpush1.msra.mxu0 0.0
    %182 = vmatprep.subr.mxu0 0.0
    %183 = vmatpush1.msra.mxu0 0.0
    %184 = vmatprep.subr.mxu0 0.0
    %185 = vmatpush1.msra.mxu0 0.0
    %186 = vmatprep.subr.mxu0 0.0
    %187 = vmatpush1.msra.mxu0 0.0
    %188 = vmatprep.subr.mxu0 0.0
    %189 = vmatpush1.msra.mxu0 0.0
    %190 = vmatprep.subr.mxu0 0.0
    %191 = vmatpush1.msra.mxu0 0.0
    %192 = vmatprep.subr.mxu0 0.0
    %193 = vmatpush1.msra.mxu0 0.0
    %194 = vmatprep.subr.mxu0 0.0
    %195 = vmatpush1.msra.mxu0 0.0
    %196 = vmatprep.subr.mxu0 0.0
    %197 = vmatpush1.msra.mxu0 0.0
    %198 = vmatprep.subr.mxu0 0.0
    %199 = vmatpush1.msra.mxu0 0.0
    %200 = vmatprep.subr.mxu0 0.0
    %201 = vmatpush1.msra.mxu0 0.0
    %202 = vmatprep.subr.mxu0 0.0
    %203 = vmatpush1.msra.mxu0 0.0
    %204 = vmatprep.subr.mxu0 0.0
    %205 = vmatpush1.msra.mxu0 0.0
    %206 = vmatprep.subr.mxu0 0.0
    %207 = vmatpush1.msra.mxu0 0.0
    %208 = vmatprep.subr.mxu0 0.0
    %209 = vmatpush1.msra.mxu0 0.0
    %210 = vmatprep.subr.mxu0 0.0
    %211 = vmatpush1.msra.mxu0 0.0
    %212 = vmatprep.subr.mxu0 0.0
    %213 = vmatpush1.msra.mxu0 0.0
    %214 = vmatprep.subr.mxu0 0.0
    %215 = vmatpush1.msra.mxu0 0.0
    %216 = vmatprep.subr.mxu0 0.0
    %217 = vmatpush1.msra.mxu0 0.0
    %218 = vmatprep.subr.mxu0 0.0
    %219 = vmatpush1.msra.mxu0 0.0
    %220 = vmatprep.subr.mxu0 0.0
    %221 = vmatpush1.msra.mxu0 0.0
    %222 = vmatprep.subr.mxu0 0.0
    %223 = vmatpush1.msra.mxu0 0.0
    %224 = vmatprep.mubr.f32.mxu0 0.0
    %225 = vmatmul.mubr.f32.gmra.mrb[0].mxu0 %v155
    %v226 = vpop.f32.mrb[0].mxu0
    %v227 = vadd.f32 %v150, %v226
    %v228 = vpop.f32.mrb[0].mxu0
    %229 = vdwg.mxu0
    %v230 = vld [vmem:[%s4] sm:$0x1]
    %v232 = vlaneseq
    %v233 = vshrl.u32 %v232, 7
    %v234 = vsub.s32 0, %v233
    %v235 = vrot.slane %v230, %v234
    %v237 = vadd.f32 %v227, %v235
    %v238 = vmax.f32 %v237, 0.0
    %v239 = vld [vmem:[%s5] sm:$0xff]
    %v240 = vld [vmem:[%s5 + $0x8] sm:$0xff]
    %v241 = vld [vmem:[%s5 + $0x10] sm:$0xff]
    %v242 = vld [vmem:[%s5 + $0x18] sm:$0xff]
    %v243 = vld [vmem:[%s6] sm:$0x1]
    %v245 = vlaneseq
    %v246 = vshrl.u32 %v245, 7
    %v247 = vsub.s32 0, %v246
    %v248 = vrot.slane %v243, %v247
    %vm250 = vcmask 261120
    %v252 = vsel %vm250, %v238, 0
    %254 = vmatprep.subr.mxu0 0.0
    %255 = vmatpush1.msra.mxu0 %v239
    %256 = vmatprep.subr.mxu0 0.0
    %257 = vmatpush1.msra.mxu0 %v240
    %258 = vmatprep.subr.mxu0 0.0
    %259 = vmatpush1.msra.mxu0 %v241
    %260 = vmatprep.subr.mxu0 0.0
    %261 = vmatpush1.msra.mxu0 %v242
    %262 = vmatprep.subr.mxu0 0.0
    %263 = vmatpush1.msra.mxu0 0.0
    %264 = vmatprep.subr.mxu0 0.0
    %265 = vmatpush1.msra.mxu0 0.0
    %266 = vmatprep.subr.mxu0 0.0
    %267 = vmatpush1.msra.mxu0 0.0
    %268 = vmatprep.subr.mxu0 0.0
    %269 = vmatpush1.msra.mxu0 0.0
    %270 = vmatprep.subr.mxu0 0.0
    %271 = vmatpush1.msra.mxu0 0.0
    %272 = vmatprep.subr.mxu0 0.0
    %273 = vmatpush1.msra.mxu0 0.0
    %274 = vmatprep.subr.mxu0 0.0
    %275 = vmatpush1.msra.mxu0 0.0
    %276 = vmatprep.subr.mxu0 0.0
    %277 = vmatpush1.msra.mxu0 0.0
    %278 = vmatprep.subr.mxu0 0.0
    %279 = vmatpush1.msra.mxu0 0.0
    %280 = vmatprep.subr.mxu0 0.0
    %281 = vmatpush1.msra.mxu0 0.0
    %282 = vmatprep.subr.mxu0 0.0
    %283 = vmatpush1.msra.mxu0 0.0
    %284 = vmatprep.subr.mxu0 0.0
    %285 = vmatpush1.msra.mxu0 0.0
    %286 = vmatprep.subr.mxu0 0.0
    %287 = vmatpush1.msra.mxu0 0.0
    %288 = vmatprep.subr.mxu0 0.0
    %289 = vmatpush1.msra.mxu0 0.0
    %290 = vmatprep.subr.mxu0 0.0
    %291 = vmatpush1.msra.mxu0 0.0
    %292 = vmatprep.subr.mxu0 0.0
    %293 = vmatpush1.msra.mxu0 0.0
    %294 = vmatprep.subr.mxu0 0.0
    %295 = vmatpush1.msra.mxu0 0.0
    %296 = vmatprep.subr.mxu0 0.0
    %297 = vmatpush1.msra.mxu0 0.0
    %298 = vmatprep.subr.mxu0 0.0
    %299 = vmatpush1.msra.mxu0 0.0
    %300 = vmatprep.subr.mxu0 0.0
    %301 = vmatpush1.msra.mxu0 0.0
    %302 = vmatprep.subr.mxu0 0.0
    %303 = vmatpush1.msra.mxu0 0.0
    %304 = vmatprep.subr.mxu0 0.0
    %305 = vmatpush1.msra.mxu0 0.0
    %306 = vmatprep.subr.mxu0 0.0
    %307 = vmatpush1.msra.mxu0 0.0
    %308 = vmatprep.subr.mxu0 0.0
    %309 = vmatpush1.msra.mxu0 0.0
    %310 = vmatprep.subr.mxu0 0.0
    %311 = vmatpush1.msra.mxu0 0.0
    %312 = vmatprep.subr.mxu0 0.0
    %313 = vmatpush1.msra.mxu0 0.0
    %314 = vmatprep.subr.mxu0 0.0
    %315 = vmatpush1.msra.mxu0 0.0
    %316 = vmatprep.subr.mxu0 0.0
    %317 = vmatpush1.msra.mxu0 0.0
    %318 = vmatprep.mubr.f32.mxu0 0.0
    %319 = vmatmul.mubr.f32.gmra.mrb[0].mxu0 %v252
    %v320 = vpop.f32.mrb[0].mxu0
    %v321 = vadd.f32 %v248, %v320
    %v322 = vpop.f32.mrb[0].mxu0
    %323 = vdwg.mxu0
    %v324 = vmax.f32 %v321, 0.0
    %v325 = vld [vmem:[%s7] sm:$0x1]
    %v327 = vlaneseq
    %v328 = vshrl.u32 %v327, 7
    %v329 = vsub.s32 0, %v328
    %v330 = vrot.slane %v325, %v329
    %v332 = vmul.f32 %v324, %v330
    %v333 = vsel %vm250, %v332, 0.0
    %334 = vadd.xlane.f32.xlu0 %v333
    %v335 = vpop.xlane.xlu0 %334
    %s336 = sld [smem:[#allocation2]]
    %v337 = vstv %s336
    %v338 = vadd.f32 %v335, %v337
    %vm339 = vcmask 7168
    %340 = vst.msk [vmem:[%s9] sm:$0xff] %vm339, %v338
    // Predicated region
    $region50: #{tpu_custom_call.1} parent=1 // pred_check
      _
    $region51: #{tpu_custom_call.1} parent=1 // pred_check_branch
      %342 = sbr.rel (0) target = $region53
    $region52: #{tpu_custom_call.1} parent=1 // pred_region
      _
    $region53: #{tpu_custom_call.1} parent=1 // pred_fallthru
      _
    // Predicated region
    $region54: #{tpu_custom_call.1} parent=1 // pred_check
      _
    $region55: #{tpu_custom_call.1} parent=1 // pred_check_branch
      %344 = sbr.rel (0) target = $region57
    $region56: #{tpu_custom_call.1} parent=1 // pred_region
      _
    $region57: #{tpu_custom_call.1} parent=1 // pred_fallthru
      _
    %345 = vsyncpa [#allocation4], 1
    %346 = vsyncpa [#allocation6], 1

</llo_original>
